<compile_context>
chip_gen: v7x
topology: tpu7x:2x2x1
jax: 0.10.0
libtpu: 0.0.40
codegen_flags: <defaults>
</compile_context>

<pallas_src>
import jax
import jax.numpy as jnp
from jax.experimental import pallas as pl
from jax.experimental.pallas import tpu as pltpu

LANE = 128  # lane-dense width for all layer outputs


def mlp_kernel(x_ref,
               w0_ref, b0_ref,
               w1_ref, b1_ref,
               w2_ref, b2_ref,
               w3_ref, b3_ref,
               out_ref):
    """One row-tile of the full MLP forward; all weights resident in VMEM.

    Matmuls run in bf16 on the MXU with f32 accumulation; bias add / ReLU
    stay f32 on the VPU.
    """
    bf16 = jnp.bfloat16
    # Layer 0: Linear (no activation — matches the reference Sequential)
    h = jnp.dot(x_ref[...], w0_ref[...],
                preferred_element_type=jnp.float32) + b0_ref[...]
    # Layer 1: Linear + ReLU
    h = jnp.maximum(
        jnp.dot(h.astype(bf16), w1_ref[...],
                preferred_element_type=jnp.float32) + b1_ref[...], 0.0)
    # Layer 2: Linear + ReLU
    h = jnp.maximum(
        jnp.dot(h.astype(bf16), w2_ref[...],
                preferred_element_type=jnp.float32) + b2_ref[...], 0.0)
    # Layer 3: Linear (no activation); width already lane-padded to 128
    y = jnp.dot(h.astype(bf16), w3_ref[...],
                preferred_element_type=jnp.float32) + b3_ref[...]
    out_ref[...] = y.astype(out_ref.dtype)


def _round_up(n, m):
    return ((n + m - 1) // m) * m


def _resident_index_map(rank):
    """Index map that pins the same (full-array) block for every grid step."""
    def index_map(i):
        return (0,) * rank
    return index_map


def _choose_row_tile(batch):
    """Batch-adaptive row tile.

    Small batch: one full-batch block (block == array dims; no padding rows,
    minimal x DMA — the kernel is launch/DMA-latency bound here).
    Large batch: big tiles for the HBM roofline, but keep >= 4 grid steps so
    the parallel M axis can be sharded across TensorCores on v7x.
    """
    if batch <= 128:
        return batch
    for tm in (512, 256, 128):
        if pl.cdiv(batch, tm) >= 4:
            return tm
    return 128


def prepare_params(params):
    """One-time kernel-side parameter prep (offline in production).

    * weights are already stored [in, out] (pre-transposed);
    * cast weights to bf16 (halves HBM traffic, native MXU dtype);
    * zero-pad every layer's output width (and the next layer's input rows)
      to a multiple of 128 lanes so intermediates and the final store are
      lane-dense.  Padded columns stay exactly zero through bias/ReLU and are
      sliced off after the kernel.  Biases stay f32 (f32 VPU path).
    """
    (w0, b0), (w1, b1), (w2, b2), (w3, b3) = params
    out_dim = w3.shape[1]
    widths = [w0.shape[1], w1.shape[1], w2.shape[1], w3.shape[1]]
    pw = [_round_up(w, LANE) for w in widths]
    ins = [w0.shape[0], pw[0], pw[1], pw[2]]

    def pad_w(w, rows_to, cols_to):
        r, c = w.shape
        return jnp.pad(w, ((0, rows_to - r), (0, cols_to - c))).astype(jnp.bfloat16)

    def pad_b(b, cols_to):
        return jnp.pad(b, ((0, 0), (0, cols_to - b.shape[1]))).astype(jnp.float32)

    prepared = (pad_w(w0, ins[0], pw[0]), pad_b(b0, pw[0]),
                pad_w(w1, ins[1], pw[1]), pad_b(b1, pw[1]),
                pad_w(w2, ins[2], pw[2]), pad_b(b2, pw[2]),
                pad_w(w3, ins[3], pw[3]), pad_b(b3, pw[3]))
    return prepared, out_dim


def mlp_forward(x_nchw, prepared, out_dim):
    """prepared: flat tuple (w0,b0,...,w3,b3) from prepare_params."""
    B = x_nchw.shape[0]
    x2d = x_nchw.reshape(B, -1).astype(jnp.bfloat16)   # glue: NCHW -> [B, D]
    D = x2d.shape[1]

    w0, b0, w1, b1, w2, b2, w3, b3 = prepared
    n_pad = w3.shape[1]

    tm = _choose_row_tile(B)
    m_tiles = pl.cdiv(B, tm)
    m_out = m_tiles * tm   # padded *output allocation* only; x is NOT padded

    flat_args = (x2d, w0, b0, w1, b1, w2, b2, w3, b3)

    # x is tiled over the M grid axis (last block may be partial — rows are
    # independent, so garbage rows never contaminate valid rows and are
    # sliced off below).  Every weight/bias is a full-array block whose
    # index_map returns the same block each step (stays VMEM-resident).
    in_specs = [pl.BlockSpec((tm, D), lambda i: (i, 0))]
    in_specs += [pl.BlockSpec(a.shape, _resident_index_map(a.ndim))
                 for a in flat_args[1:]]
    # NOTE: resident weight/bias blocks could use pipeline_mode=pl.Buffered(1)
    # to drop their dead second buffer (~160 KiB); omitted since VMEM is
    # nowhere near the limit at these sizes on any generation.

    flops = 2 * m_out * (D * w0.shape[1] + w0.shape[1] * w1.shape[1]
                         + w1.shape[1] * w2.shape[1] + w2.shape[1] * n_pad)
    bytes_accessed = (sum(int(a.size) * a.dtype.itemsize for a in flat_args)
                      + m_out * n_pad * 4)
    cost = pl.CostEstimate(flops=flops, transcendentals=0,
                           bytes_accessed=bytes_accessed)

    out_padded = pl.pallas_call(
        mlp_kernel,
        out_shape=jax.ShapeDtypeStruct((m_out, n_pad), jnp.float32),
        grid=(m_tiles,),
        in_specs=in_specs,
        out_specs=pl.BlockSpec((tm, n_pad), lambda i: (i, 0)),
        compiler_params=pltpu.CompilerParams(
            dimension_semantics=("parallel",)),
        cost_estimate=cost,
    )(*flat_args)

    return out_padded[:B, :out_dim]


def init_params(key, input_size, hidden_sizes, output_size):
    """Deterministic init (PyTorch-like uniform). Weights stored [in, out]."""
    dims = [input_size, *hidden_sizes, output_size]
    params = []
    for i in range(len(dims) - 1):
        fan_in, fan_out = dims[i], dims[i + 1]
        key, wk, bk = jax.random.split(key, 3)
        bound = 1.0 / jnp.sqrt(fan_in)
        w_t = jax.random.uniform(wk, (fan_in, fan_out), jnp.float32, -bound, bound)
        b = jax.random.uniform(bk, (1, fan_out), jnp.float32, -bound, bound)
        params.append((w_t, b))
    return params


def reference_forward(x_nchw, params):
    """Pure-JAX f32 reference for sanity checking."""
    x = x_nchw.reshape(x_nchw.shape[0], -1)
    (w0, b0), (w1, b1), (w2, b2), (w3, b3) = params
    h = x @ w0 + b0
    h = jnp.maximum(h @ w1 + b1, 0.0)
    h = jnp.maximum(h @ w2 + b2, 0.0)
    return h @ w3 + b3


if __name__ == "__main__":
    # Small shapes consistent with the forward: [batch, channels, height, width]
    B, C, H, W = 2, 4, 16, 16
    input_size = C * H * W          # 1024
    hidden_sizes = (32, 64, 32)
    output_size = 1

    key = jax.random.PRNGKey(0)
    key, xk = jax.random.split(key)
    x = jax.random.normal(xk, (B, C, H, W), jnp.float32)

    params = init_params(key, input_size, hidden_sizes, output_size)
    prepared, out_dim = prepare_params(params)

    out = mlp_forward(x, prepared, out_dim)
    out = jax.block_until_ready(out)

    ref = reference_forward(x, params)
    assert out.shape == (B, output_size)
    # bf16 matmul inputs (f32 accumulation) -> loosened tolerance vs f32 ref.
    assert jnp.allclose(out, ref, atol=3e-2, rtol=3e-2), "mismatch vs reference"

    print("KERNEL_OK")
</pallas_src>

<mosaic_0001>
module attributes {stable_mosaic.version = 11 : i64} {
  func.func @mlp_kernel(%arg0: i32, %arg1: memref<2x1024xbf16, #tpu.memory_space<vmem>>, %arg2: memref<1024x128xbf16, #tpu.memory_space<vmem>>, %arg3: memref<1x128xf32, #tpu.memory_space<vmem>>, %arg4: memref<128x128xbf16, #tpu.memory_space<vmem>>, %arg5: memref<1x128xf32, #tpu.memory_space<vmem>>, %arg6: memref<128x128xbf16, #tpu.memory_space<vmem>>, %arg7: memref<1x128xf32, #tpu.memory_space<vmem>>, %arg8: memref<128x128xbf16, #tpu.memory_space<vmem>>, %arg9: memref<1x128xf32, #tpu.memory_space<vmem>>, %arg10: memref<2x128xf32, #tpu.memory_space<vmem>>) attributes {dimension_semantics = [#tpu.dimension_semantics<parallel>], iteration_bounds = array<i64: 1>, scalar_prefetch = 0 : i64, scratch_operands = 0 : i64, tpu.core_type = #tpu.core_type<tc>, window_params = [{transform_indices = @transform_0, window_bounds = array<i64: 2, 1024>}, {pipeline_mode = #tpu.pipeline_mode<synchronous>, transform_indices = @transform_1, window_bounds = array<i64: 1024, 128>}, {pipeline_mode = #tpu.pipeline_mode<synchronous>, transform_indices = @transform_2, window_bounds = array<i64: 1, 128>}, {pipeline_mode = #tpu.pipeline_mode<synchronous>, transform_indices = @transform_3, window_bounds = array<i64: 128, 128>}, {pipeline_mode = #tpu.pipeline_mode<synchronous>, transform_indices = @transform_4, window_bounds = array<i64: 1, 128>}, {pipeline_mode = #tpu.pipeline_mode<synchronous>, transform_indices = @transform_5, window_bounds = array<i64: 128, 128>}, {pipeline_mode = #tpu.pipeline_mode<synchronous>, transform_indices = @transform_6, window_bounds = array<i64: 1, 128>}, {pipeline_mode = #tpu.pipeline_mode<synchronous>, transform_indices = @transform_7, window_bounds = array<i64: 128, 128>}, {pipeline_mode = #tpu.pipeline_mode<synchronous>, transform_indices = @transform_8, window_bounds = array<i64: 1, 128>}, {transform_indices = @transform_9, window_bounds = array<i64: 2, 128>}]} {
    %c0 = arith.constant 0 : index
    %c0_0 = arith.constant 0 : index
    %0 = vector.load %arg1[%c0, %c0_0] : memref<2x1024xbf16, #tpu.memory_space<vmem>>, vector<2x1024xbf16>
    %c0_1 = arith.constant 0 : index
    %c0_2 = arith.constant 0 : index
    %1 = vector.load %arg2[%c0_1, %c0_2] : memref<1024x128xbf16, #tpu.memory_space<vmem>>, vector<1024x128xbf16>
    %cst = arith.constant dense<0.000000e+00> : vector<2x128xf32>
    %2 = tpu.matmul %0, %1, %cst {dimension_numbers = #tpu.dot_dimension_numbers<[1], [0], [0], [1], [0, 0, 1, 1], [], []>} : vector<2x1024xbf16>, vector<1024x128xbf16>, vector<2x128xf32> -> vector<2x128xf32>
    %c0_3 = arith.constant 0 : index
    %c0_4 = arith.constant 0 : index
    %3 = vector.load %arg3[%c0_3, %c0_4] : memref<1x128xf32, #tpu.memory_space<vmem>>, vector<1x128xf32>
    %4 = vector.broadcast %3 : vector<1x128xf32> to vector<2x128xf32>
    %5 = arith.addf %2, %4 : vector<2x128xf32>
    %6 = arith.truncf %5 : vector<2x128xf32> to vector<2x128xbf16>
    %c0_5 = arith.constant 0 : index
    %c0_6 = arith.constant 0 : index
    %7 = vector.load %arg4[%c0_5, %c0_6] : memref<128x128xbf16, #tpu.memory_space<vmem>>, vector<128x128xbf16>
    %cst_7 = arith.constant dense<0.000000e+00> : vector<2x128xf32>
    %8 = tpu.matmul %6, %7, %cst_7 {dimension_numbers = #tpu.dot_dimension_numbers<[1], [0], [0], [1], [0, 0, 1, 1], [], []>} : vector<2x128xbf16>, vector<128x128xbf16>, vector<2x128xf32> -> vector<2x128xf32>
    %c0_8 = arith.constant 0 : index
    %c0_9 = arith.constant 0 : index
    %9 = vector.load %arg5[%c0_8, %c0_9] : memref<1x128xf32, #tpu.memory_space<vmem>>, vector<1x128xf32>
    %10 = vector.broadcast %9 : vector<1x128xf32> to vector<2x128xf32>
    %11 = arith.addf %8, %10 : vector<2x128xf32>
    %cst_10 = arith.constant 0.000000e+00 : f32
    %12 = vector.broadcast %cst_10 : f32 to vector<2x128xf32>
    %13 = arith.maximumf %11, %12 : vector<2x128xf32>
    %14 = arith.truncf %13 : vector<2x128xf32> to vector<2x128xbf16>
    %c0_11 = arith.constant 0 : index
    %c0_12 = arith.constant 0 : index
    %15 = vector.load %arg6[%c0_11, %c0_12] : memref<128x128xbf16, #tpu.memory_space<vmem>>, vector<128x128xbf16>
    %cst_13 = arith.constant dense<0.000000e+00> : vector<2x128xf32>
    %16 = tpu.matmul %14, %15, %cst_13 {dimension_numbers = #tpu.dot_dimension_numbers<[1], [0], [0], [1], [0, 0, 1, 1], [], []>} : vector<2x128xbf16>, vector<128x128xbf16>, vector<2x128xf32> -> vector<2x128xf32>
    %c0_14 = arith.constant 0 : index
    %c0_15 = arith.constant 0 : index
    %17 = vector.load %arg7[%c0_14, %c0_15] : memref<1x128xf32, #tpu.memory_space<vmem>>, vector<1x128xf32>
    %18 = vector.broadcast %17 : vector<1x128xf32> to vector<2x128xf32>
    %19 = arith.addf %16, %18 : vector<2x128xf32>
    %cst_16 = arith.constant 0.000000e+00 : f32
    %20 = vector.broadcast %cst_16 : f32 to vector<2x128xf32>
    %21 = arith.maximumf %19, %20 : vector<2x128xf32>
    %22 = arith.truncf %21 : vector<2x128xf32> to vector<2x128xbf16>
    %c0_17 = arith.constant 0 : index
    %c0_18 = arith.constant 0 : index
    %23 = vector.load %arg8[%c0_17, %c0_18] : memref<128x128xbf16, #tpu.memory_space<vmem>>, vector<128x128xbf16>
    %cst_19 = arith.constant dense<0.000000e+00> : vector<2x128xf32>
    %24 = tpu.matmul %22, %23, %cst_19 {dimension_numbers = #tpu.dot_dimension_numbers<[1], [0], [0], [1], [0, 0, 1, 1], [], []>} : vector<2x128xbf16>, vector<128x128xbf16>, vector<2x128xf32> -> vector<2x128xf32>
    %c0_20 = arith.constant 0 : index
    %c0_21 = arith.constant 0 : index
    %25 = vector.load %arg9[%c0_20, %c0_21] : memref<1x128xf32, #tpu.memory_space<vmem>>, vector<1x128xf32>
    %26 = vector.broadcast %25 : vector<1x128xf32> to vector<2x128xf32>
    %27 = arith.addf %24, %26 : vector<2x128xf32>
    %c0_22 = arith.constant 0 : index
    %c0_23 = arith.constant 0 : index
    %28 = vector.load %arg10[%c0_22, %c0_23] : memref<2x128xf32, #tpu.memory_space<vmem>>, vector<2x128xf32>
    tpu.vector_store %arg10[%c0_22, %c0_23], %27 {strides = array<i32>} : memref<2x128xf32, #tpu.memory_space<vmem>>, vector<2x128xf32>,
    return
  }
  func.func @transform_0(%arg0: i32) -> (i32, i32) {
    %c0_i32 = arith.constant 0 : i32
    %c0_i32_0 = arith.constant 0 : i32
    return %arg0, %c0_i32 : i32, i32
  }
  func.func @transform_1(%arg0: i32) -> (i32, i32) {
    %c0_i32 = arith.constant 0 : i32
    %c0_i32_0 = arith.constant 0 : i32
    %c0_i32_1 = arith.constant 0 : i32
    return %c0_i32, %c0_i32_0 : i32, i32
  }
  func.func @transform_2(%arg0: i32) -> (i32, i32) {
    %c0_i32 = arith.constant 0 : i32
    %c0_i32_0 = arith.constant 0 : i32
    %c0_i32_1 = arith.constant 0 : i32
    return %c0_i32, %c0_i32_0 : i32, i32
  }
  func.func @transform_3(%arg0: i32) -> (i32, i32) {
    %c0_i32 = arith.constant 0 : i32
    %c0_i32_0 = arith.constant 0 : i32
    %c0_i32_1 = arith.constant 0 : i32
    return %c0_i32, %c0_i32_0 : i32, i32
  }
  func.func @transform_4(%arg0: i32) -> (i32, i32) {
    %c0_i32 = arith.constant 0 : i32
    %c0_i32_0 = arith.constant 0 : i32
    %c0_i32_1 = arith.constant 0 : i32
    return %c0_i32, %c0_i32_0 : i32, i32
  }
  func.func @transform_5(%arg0: i32) -> (i32, i32) {
    %c0_i32 = arith.constant 0 : i32
    %c0_i32_0 = arith.constant 0 : i32
    %c0_i32_1 = arith.constant 0 : i32
    return %c0_i32, %c0_i32_0 : i32, i32
  }
  func.func @transform_6(%arg0: i32) -> (i32, i32) {
    %c0_i32 = arith.constant 0 : i32
    %c0_i32_0 = arith.constant 0 : i32
    %c0_i32_1 = arith.constant 0 : i32
    return %c0_i32, %c0_i32_0 : i32, i32
  }
  func.func @transform_7(%arg0: i32) -> (i32, i32) {
    %c0_i32 = arith.constant 0 : i32
    %c0_i32_0 = arith.constant 0 : i32
    %c0_i32_1 = arith.constant 0 : i32
    return %c0_i32, %c0_i32_0 : i32, i32
  }
  func.func @transform_8(%arg0: i32) -> (i32, i32) {
    %c0_i32 = arith.constant 0 : i32
    %c0_i32_0 = arith.constant 0 : i32
    %c0_i32_1 = arith.constant 0 : i32
    return %c0_i32, %c0_i32_0 : i32, i32
  }
  func.func @transform_9(%arg0: i32) -> (i32, i32) {
    %c0_i32 = arith.constant 0 : i32
    %c0_i32_0 = arith.constant 0 : i32
    return %arg0, %c0_i32 : i32, i32
  }
}

</mosaic_0001>

<llo_original>
// kernel: tpu_custom_call.1
$region0: #{tpu_custom_call.1}
  #allocation0 [shape = 'u32[]', space=smem, size = 0x4, offset = 0x4, fixed_abs, tag = 'smem constant byte address 0x4 - core index']
  #allocation1 [shape = 'u32[144,128]{1,0:T(1,128)}', space=vmem, size = 0x12000, scoped, tag = 'internal scratch']
  %s0 = inlined_call_operand.hbm [shape: bf16[2,1024], index: 0, kind: input, shape index: {}]
  %s1 = inlined_call_operand.hbm [shape: bf16[1024,128], index: 1, kind: input, shape index: {}]
  %s2 = inlined_call_operand.vmem [shape: f32[1,128], index: 2, kind: input, shape index: {}]
  %s3 = inlined_call_operand.hbm [shape: bf16[128,128], index: 3, kind: input, shape index: {}]
  %s4 = inlined_call_operand.vmem [shape: f32[1,128], index: 4, kind: input, shape index: {}]
  %s5 = inlined_call_operand.hbm [shape: bf16[128,128], index: 5, kind: input, shape index: {}]
  %s6 = inlined_call_operand.vmem [shape: f32[1,128], index: 6, kind: input, shape index: {}]
  %s7 = inlined_call_operand.hbm [shape: bf16[128,128], index: 7, kind: input, shape index: {}]
  %s8 = inlined_call_operand.vmem [shape: f32[1,128], index: 8, kind: input, shape index: {}]
  %s9 = inlined_call_operand.hbm [shape: f32[2,128], index: 9, kind: output, shape index: {}]
  %s10 = sld [smem:[#allocation0]]
  $region66: #{tpu_custom_call.1} parent=0
    _
  %s12 = ssub.s32 1, %s10
  %s13 = scalar_select 0, %s12, %s10
  $region1: #{tpu_custom_call.1} parent=0
    #allocation2 [shape = 'u8[4096]{0}', space=vmem, size = 0x1000, scoped, tag = 'input window, operand 0, single buffered']
    #allocation3 [shape = 's32[1]{0}', space=sflag, size = 0x4, scoped, tag = 'scoped memory for tpu_custom_call.1']
    #allocation4 [shape = 's32[1]{0}', space=sflag, size = 0x4, scoped, tag = 'scoped memory for tpu_custom_call.1']
    #allocation5 [shape = 'u8[262144]{0}', space=vmem, size = 0x40000, scoped, tag = 'input window, operand 1, single buffered']
    #allocation6 [shape = 's32[1]{0}', space=sflag, size = 0x4, scoped, tag = 'scoped memory for tpu_custom_call.1']
    #allocation7 [shape = 'u8[32768]{0}', space=vmem, size = 0x8000, scoped, tag = 'input window, operand 3, single buffered']
    #allocation8 [shape = 'u8[32768]{0}', space=vmem, size = 0x8000, scoped, tag = 'input window, operand 5, single buffered']
    #allocation9 [shape = 's32[1]{0}', space=sflag, size = 0x4, scoped, tag = 'scoped memory for tpu_custom_call.1']
    #allocation10 [shape = 'u8[32768]{0}', space=vmem, size = 0x8000, scoped, tag = 'input window, operand 7, single buffered']
    #allocation11 [shape = 'u8[1024]{0}', space=vmem, size = 0x400, scoped, tag = 'output window, operand 0, single buffered']
    %14 = vsyncpa [#allocation3], 0
    %15 = vsyncpa [#allocation6], 0
    %16 = vsyncpa [#allocation9], 0
    %17 = vsyncpa [#allocation4], 0
    // Predicated region
    $region2: #{tpu_custom_call.1} parent=1 // pred_check
      _
    $region3: #{tpu_custom_call.1} parent=1 // pred_check_branch
      %19 = sbr.rel (0) target = $region5
    $region4: #{tpu_custom_call.1} parent=1 // pred_region
      %s21 = ssub.s32 128, 128
      %22 = vsyncadd [#allocation3], %s21
      %s24 = sshll.u32 [#allocation2], 4
      %s25 = int_to_ptr.vmem [resolvable:$true] %s24
      %27 = dma.hbm_to_vmem [thread:$0]  %s0, 128, %s25, [#allocation3]
    $region5: #{tpu_custom_call.1} parent=1 // pred_fallthru
      _
    // Predicated region
    $region6: #{tpu_custom_call.1} parent=1 // pred_check
      _
    $region7: #{tpu_custom_call.1} parent=1 // pred_check_branch
      %29 = sbr.rel (0) target = $region9
    $region8: #{tpu_custom_call.1} parent=1 // pred_region
      %s31 = ssub.s32 8192, 8192
      %32 = vsyncadd [#allocation6], %s31
      %s33 = sshll.u32 [#allocation5], 4
      %s34 = int_to_ptr.vmem [resolvable:$true] %s33
      %39 = dma.hbm_to_vmem [thread:$0]  %s1, 8192, %s34, [#allocation6], 64, 64, 4
    $region9: #{tpu_custom_call.1} parent=1 // pred_fallthru
      _
    // Predicated region
    $region10: #{tpu_custom_call.1} parent=1 // pred_check
      _
    $region11: #{tpu_custom_call.1} parent=1 // pred_check_branch
      %41 = sbr.rel (0) target = $region13
    $region12: #{tpu_custom_call.1} parent=1 // pred_region
      _
    $region13: #{tpu_custom_call.1} parent=1 // pred_fallthru
      _
    // Predicated region
    $region14: #{tpu_custom_call.1} parent=1 // pred_check
      _
    $region15: #{tpu_custom_call.1} parent=1 // pred_check_branch
      %43 = sbr.rel (0) target = $region17
    $region16: #{tpu_custom_call.1} parent=1 // pred_region
      %s45 = ssub.s32 1024, 1024
      %46 = vsyncadd [#allocation6], %s45
      %s47 = sshll.u32 [#allocation7], 4
      %s48 = int_to_ptr.vmem [resolvable:$true] %s47
      %53 = dma.hbm_to_vmem [thread:$0]  %s3, 1024, %s48, [#allocation6], 64, 64, 4
    $region17: #{tpu_custom_call.1} parent=1 // pred_fallthru
      _
    // Predicated region
    $region18: #{tpu_custom_call.1} parent=1 // pred_check
      _
    $region19: #{tpu_custom_call.1} parent=1 // pred_check_branch
      %55 = sbr.rel (0) target = $region21
    $region20: #{tpu_custom_call.1} parent=1 // pred_region
      _
    $region21: #{tpu_custom_call.1} parent=1 // pred_fallthru
      _
    // Predicated region
    $region22: #{tpu_custom_call.1} parent=1 // pred_check
      _
    $region23: #{tpu_custom_call.1} parent=1 // pred_check_branch
      %57 = sbr.rel (0) target = $region25
    $region24: #{tpu_custom_call.1} parent=1 // pred_region
      %s59 = ssub.s32 1024, 1024
      %60 = vsyncadd [#allocation9], %s59
      %s61 = sshll.u32 [#allocation8], 4
      %s62 = int_to_ptr.vmem [resolvable:$true] %s61
      %67 = dma.hbm_to_vmem [thread:$0]  %s5, 1024, %s62, [#allocation9], 64, 64, 4
    $region25: #{tpu_custom_call.1} parent=1 // pred_fallthru
      _
    // Predicated region
    $region26: #{tpu_custom_call.1} parent=1 // pred_check
      _
    $region27: #{tpu_custom_call.1} parent=1 // pred_check_branch
      %69 = sbr.rel (0) target = $region29
    $region28: #{tpu_custom_call.1} parent=1 // pred_region
      _
    $region29: #{tpu_custom_call.1} parent=1 // pred_fallthru
      _
    // Predicated region
    $region30: #{tpu_custom_call.1} parent=1 // pred_check
      _
    $region31: #{tpu_custom_call.1} parent=1 // pred_check_branch
      %71 = sbr.rel (0) target = $region33
    $region32: #{tpu_custom_call.1} parent=1 // pred_region
      %s73 = ssub.s32 1024, 1024
      %74 = vsyncadd [#allocation9], %s73
      %s75 = sshll.u32 [#allocation10], 4
      %s76 = int_to_ptr.vmem [resolvable:$true] %s75
      %81 = dma.hbm_to_vmem [thread:$0]  %s7, 1024, %s76, [#allocation9], 64, 64, 4
    $region33: #{tpu_custom_call.1} parent=1 // pred_fallthru
      _
    // Predicated region
    $region34: #{tpu_custom_call.1} parent=1 // pred_check
      _
    $region35: #{tpu_custom_call.1} parent=1 // pred_check_branch
      %83 = sbr.rel (0) target = $region37
    $region36: #{tpu_custom_call.1} parent=1 // pred_region
      _
    $region37: #{tpu_custom_call.1} parent=1 // pred_fallthru
      _
    // Predicated region
    $region38: #{tpu_custom_call.1} parent=1 // pred_check
      _
    $region39: #{tpu_custom_call.1} parent=1 // pred_check_branch
      %85 = sbr.rel (0) target = $region41
    $region40: #{tpu_custom_call.1} parent=1 // pred_region
      %86 = dma.done [#allocation3], 128
    $region41: #{tpu_custom_call.1} parent=1 // pred_fallthru
      _
    // Predicated region
    $region42: #{tpu_custom_call.1} parent=1 // pred_check
      _
    $region43: #{tpu_custom_call.1} parent=1 // pred_check_branch
      %88 = sbr.rel (0) target = $region45
    $region44: #{tpu_custom_call.1} parent=1 // pred_region
      %89 = dma.done [#allocation6], 8192
    $region45: #{tpu_custom_call.1} parent=1 // pred_fallthru
      _
    // Predicated region
    $region46: #{tpu_custom_call.1} parent=1 // pred_check
      _
    $region47: #{tpu_custom_call.1} parent=1 // pred_check_branch
      %91 = sbr.rel (0) target = $region49
    $region48: #{tpu_custom_call.1} parent=1 // pred_region
      %92 = dma.done [#allocation6], 1024
    $region49: #{tpu_custom_call.1} parent=1 // pred_fallthru
      _
    // Predicated region
    $region50: #{tpu_custom_call.1} parent=1 // pred_check
      _
    $region51: #{tpu_custom_call.1} parent=1 // pred_check_branch
      %94 = sbr.rel (0) target = $region53
    $region52: #{tpu_custom_call.1} parent=1 // pred_region
      %95 = dma.done [#allocation9], 1024
    $region53: #{tpu_custom_call.1} parent=1 // pred_fallthru
      _
    // Predicated region
    $region54: #{tpu_custom_call.1} parent=1 // pred_check
      _
    $region55: #{tpu_custom_call.1} parent=1 // pred_check_branch
      %97 = sbr.rel (0) target = $region57
    $region56: #{tpu_custom_call.1} parent=1 // pred_region
      %98 = dma.done [#allocation9], 1024
    $region57: #{tpu_custom_call.1} parent=1 // pred_fallthru
      _
    %v100 = vld [vmem:[#allocation2] sm:$0xff]
    %v101 = vld [vmem:[#allocation5] sm:$0xf]
    %v102 = vld [vmem:[#allocation5 + $0x4] sm:$0xf]
    %v103 = vld [vmem:[#allocation5 + $0x8] sm:$0xf]
    %v104 = vld [vmem:[#allocation5 + $0xc] sm:$0xf]
    %v105 = vld [vmem:[#allocation5 + $0x10] sm:$0xf]
    %v106 = vld [vmem:[#allocation5 + $0x14] sm:$0xf]
    %v107 = vld [vmem:[#allocation5 + $0x18] sm:$0xf]
    %v108 = vld [vmem:[#allocation5 + $0x1c] sm:$0xf]
    %v109 = vld [vmem:[#allocation5 + $0x20] sm:$0xf]
    %v110 = vld [vmem:[#allocation5 + $0x24] sm:$0xf]
    %v111 = vld [vmem:[#allocation5 + $0x28] sm:$0xf]
    %v112 = vld [vmem:[#allocation5 + $0x2c] sm:$0xf]
    %v113 = vld [vmem:[#allocation5 + $0x30] sm:$0xf]
    %v114 = vld [vmem:[#allocation5 + $0x34] sm:$0xf]
    %v115 = vld [vmem:[#allocation5 + $0x38] sm:$0xf]
    %v116 = vld [vmem:[#allocation5 + $0x3c] sm:$0xf]
    %v117 = vld [vmem:[#allocation5 + $0x40] sm:$0xf]
    %v118 = vld [vmem:[#allocation5 + $0x44] sm:$0xf]
    %v119 = vld [vmem:[#allocation5 + $0x48] sm:$0xf]
    %v120 = vld [vmem:[#allocation5 + $0x4c] sm:$0xf]
    %v121 = vld [vmem:[#allocation5 + $0x50] sm:$0xf]
    %v122 = vld [vmem:[#allocation5 + $0x54] sm:$0xf]
    %v123 = vld [vmem:[#allocation5 + $0x58] sm:$0xf]
    %v124 = vld [vmem:[#allocation5 + $0x5c] sm:$0xf]
    %v125 = vld [vmem:[#allocation5 + $0x60] sm:$0xf]
    %v126 = vld [vmem:[#allocation5 + $0x64] sm:$0xf]
    %v127 = vld [vmem:[#allocation5 + $0x68] sm:$0xf]
    %v128 = vld [vmem:[#allocation5 + $0x6c] sm:$0xf]
    %v129 = vld [vmem:[#allocation5 + $0x70] sm:$0xf]
    %v130 = vld [vmem:[#allocation5 + $0x74] sm:$0xf]
    %v131 = vld [vmem:[#allocation5 + $0x78] sm:$0xf]
    %v132 = vld [vmem:[#allocation5 + $0x7c] sm:$0xf]
    %v133 = vld [vmem:[#allocation5 + $0x80] sm:$0xf]
    %v134 = vld [vmem:[#allocation5 + $0x84] sm:$0xf]
    %v135 = vld [vmem:[#allocation5 + $0x88] sm:$0xf]
    %v136 = vld [vmem:[#allocation5 + $0x8c] sm:$0xf]
    %v137 = vld [vmem:[#allocation5 + $0x90] sm:$0xf]
    %v138 = vld [vmem:[#allocation5 + $0x94] sm:$0xf]
    %v139 = vld [vmem:[#allocation5 + $0x98] sm:$0xf]
    %v140 = vld [vmem:[#allocation5 + $0x9c] sm:$0xf]
    %v141 = vld [vmem:[#allocation5 + $0xa0] sm:$0xf]
    %v142 = vld [vmem:[#allocation5 + $0xa4] sm:$0xf]
    %v143 = vld [vmem:[#allocation5 + $0xa8] sm:$0xf]
    %v144 = vld [vmem:[#allocation5 + $0xac] sm:$0xf]
    %v145 = vld [vmem:[#allocation5 + $0xb0] sm:$0xf]
    %v146 = vld [vmem:[#allocation5 + $0xb4] sm:$0xf]
    %v147 = vld [vmem:[#allocation5 + $0xb8] sm:$0xf]
    %v148 = vld [vmem:[#allocation5 + $0xbc] sm:$0xf]
    %v149 = vld [vmem:[#allocation5 + $0xc0] sm:$0xf]
    %v150 = vld [vmem:[#allocation5 + $0xc4] sm:$0xf]
    %v151 = vld [vmem:[#allocation5 + $0xc8] sm:$0xf]
    %v152 = vld [vmem:[#allocation5 + $0xcc] sm:$0xf]
    %v153 = vld [vmem:[#allocation5 + $0xd0] sm:$0xf]
    %v154 = vld [vmem:[#allocation5 + $0xd4] sm:$0xf]
    %v155 = vld [vmem:[#allocation5 + $0xd8] sm:$0xf]
    %v156 = vld [vmem:[#allocation5 + $0xdc] sm:$0xf]
    %v157 = vld [vmem:[#allocation5 + $0xe0] sm:$0xf]
    %v158 = vld [vmem:[#allocation5 + $0xe4] sm:$0xf]
    %v159 = vld [vmem:[#allocation5 + $0xe8] sm:$0xf]
    %v160 = vld [vmem:[#allocation5 + $0xec] sm:$0xf]
    %v161 = vld [vmem:[#allocation5 + $0xf0] sm:$0xf]
    %v162 = vld [vmem:[#allocation5 + $0xf4] sm:$0xf]
    %v163 = vld [vmem:[#allocation5 + $0xf8] sm:$0xf]
    %v164 = vld [vmem:[#allocation5 + $0xfc] sm:$0xf]
    %v165 = vld [vmem:[#allocation5 + $0x100] sm:$0xf]
    %v166 = vld [vmem:[#allocation5 + $0x104] sm:$0xf]
    %v167 = vld [vmem:[#allocation5 + $0x108] sm:$0xf]
    %v168 = vld [vmem:[#allocation5 + $0x10c] sm:$0xf]
    %v169 = vld [vmem:[#allocation5 + $0x110] sm:$0xf]
    %v170 = vld [vmem:[#allocation5 + $0x114] sm:$0xf]
    %v171 = vld [vmem:[#allocation5 + $0x118] sm:$0xf]
    %v172 = vld [vmem:[#allocation5 + $0x11c] sm:$0xf]
    %v173 = vld [vmem:[#allocation5 + $0x120] sm:$0xf]
    %v174 = vld [vmem:[#allocation5 + $0x124] sm:$0xf]
    %v175 = vld [vmem:[#allocation5 + $0x128] sm:$0xf]
    %v176 = vld [vmem:[#allocation5 + $0x12c] sm:$0xf]
    %v177 = vld [vmem:[#allocation5 + $0x130] sm:$0xf]
    %v178 = vld [vmem:[#allocation5 + $0x134] sm:$0xf]
    %v179 = vld [vmem:[#allocation5 + $0x138] sm:$0xf]
    %v180 = vld [vmem:[#allocation5 + $0x13c] sm:$0xf]
    %v181 = vld [vmem:[#allocation5 + $0x140] sm:$0xf]
    %v182 = vld [vmem:[#allocation5 + $0x144] sm:$0xf]
    %v183 = vld [vmem:[#allocation5 + $0x148] sm:$0xf]
    %v184 = vld [vmem:[#allocation5 + $0x14c] sm:$0xf]
    %v185 = vld [vmem:[#allocation5 + $0x150] sm:$0xf]
    %v186 = vld [vmem:[#allocation5 + $0x154] sm:$0xf]
    %v187 = vld [vmem:[#allocation5 + $0x158] sm:$0xf]
    %v188 = vld [vmem:[#allocation5 + $0x15c] sm:$0xf]
    %v189 = vld [vmem:[#allocation5 + $0x160] sm:$0xf]
    %v190 = vld [vmem:[#allocation5 + $0x164] sm:$0xf]
    %v191 = vld [vmem:[#allocation5 + $0x168] sm:$0xf]
    %v192 = vld [vmem:[#allocation5 + $0x16c] sm:$0xf]
    %v193 = vld [vmem:[#allocation5 + $0x170] sm:$0xf]
    %v194 = vld [vmem:[#allocation5 + $0x174] sm:$0xf]
    %v195 = vld [vmem:[#allocation5 + $0x178] sm:$0xf]
    %v196 = vld [vmem:[#allocation5 + $0x17c] sm:$0xf]
    %v197 = vld [vmem:[#allocation5 + $0x180] sm:$0xf]
    %v198 = vld [vmem:[#allocation5 + $0x184] sm:$0xf]
    %v199 = vld [vmem:[#allocation5 + $0x188] sm:$0xf]
    %v200 = vld [vmem:[#allocation5 + $0x18c] sm:$0xf]
    %v201 = vld [vmem:[#allocation5 + $0x190] sm:$0xf]
    %v202 = vld [vmem:[#allocation5 + $0x194] sm:$0xf]
    %v203 = vld [vmem:[#allocation5 + $0x198] sm:$0xf]
    %v204 = vld [vmem:[#allocation5 + $0x19c] sm:$0xf]
    %v205 = vld [vmem:[#allocation5 + $0x1a0] sm:$0xf]
    %v206 = vld [vmem:[#allocation5 + $0x1a4] sm:$0xf]
    %v207 = vld [vmem:[#allocation5 + $0x1a8] sm:$0xf]
    %v208 = vld [vmem:[#allocation5 + $0x1ac] sm:$0xf]
    %v209 = vld [vmem:[#allocation5 + $0x1b0] sm:$0xf]
    %v210 = vld [vmem:[#allocation5 + $0x1b4] sm:$0xf]
    %v211 = vld [vmem:[#allocation5 + $0x1b8] sm:$0xf]
    %v212 = vld [vmem:[#allocation5 + $0x1bc] sm:$0xf]
    %v213 = vld [vmem:[#allocation5 + $0x1c0] sm:$0xf]
    %v214 = vld [vmem:[#allocation5 + $0x1c4] sm:$0xf]
    %v215 = vld [vmem:[#allocation5 + $0x1c8] sm:$0xf]
    %v216 = vld [vmem:[#allocation5 + $0x1cc] sm:$0xf]
    %v217 = vld [vmem:[#allocation5 + $0x1d0] sm:$0xf]
    %v218 = vld [vmem:[#allocation5 + $0x1d4] sm:$0xf]
    %v219 = vld [vmem:[#allocation5 + $0x1d8] sm:$0xf]
    %v220 = vld [vmem:[#allocation5 + $0x1dc] sm:$0xf]
    %v221 = vld [vmem:[#allocation5 + $0x1e0] sm:$0xf]
    %v222 = vld [vmem:[#allocation5 + $0x1e4] sm:$0xf]
    %v223 = vld [vmem:[#allocation5 + $0x1e8] sm:$0xf]
    %v224 = vld [vmem:[#allocation5 + $0x1ec] sm:$0xf]
    %v225 = vld [vmem:[#allocation5 + $0x1f0] sm:$0xf]
    %v226 = vld [vmem:[#allocation5 + $0x1f4] sm:$0xf]
    %v227 = vld [vmem:[#allocation5 + $0x1f8] sm:$0xf]
    %v228 = vld [vmem:[#allocation5 + $0x1fc] sm:$0xf]
    %v229 = vld [vmem:[%s2] sm:$0x1]
    %v231 = vlaneseq
    %v232 = vshrl.u32 %v231, 7
    %v233 = vsub.s32 0, %v232
    %v234 = vrot.slane %v229, %v233
    %v237 = vcombine.high %v100, %v100
    %v239 = vunpack.c.l.s4 1966171168
    %v240 = vunpack.c.0.s8 %v239
    %v241 = vlaneseq
    %v242 = vshrl.u32 %v241, 7
    %v243 = vsub.s32 %v240, %v242
    %v244 = vrot.slane %v100, %v243
    %v246 = vunpack.c.l.s4 1966171168
    %v247 = vunpack.c.0.s8 %v246
    %v248 = vlaneseq
    %v249 = vshrl.u32 %v248, 7
    %v250 = vsub.s32 %v247, %v249
    %v251 = vrot.slane %v237, %v250
    %v252 = vcombine.high %v244, %v244
    %v253 = vcombine.high %v251, %v251
    %v255 = vunpack.c.l.s4 1966171168
    %v256 = vunpack.c.0.s8 %v255
    %v257 = vlaneseq
    %v258 = vshrl.u32 %v257, 7
    %v259 = vsub.s32 %v256, %v258
    %v260 = vrot.slane %v244, %v259
    %v262 = vunpack.c.l.s4 1966171168
    %v263 = vunpack.c.0.s8 %v262
    %v264 = vlaneseq
    %v265 = vshrl.u32 %v264, 7
    %v266 = vsub.s32 %v263, %v265
    %v267 = vrot.slane %v251, %v266
    %v269 = vunpack.c.l.s4 1966171168
    %v270 = vunpack.c.0.s8 %v269
    %v271 = vlaneseq
    %v272 = vshrl.u32 %v271, 7
    %v273 = vsub.s32 %v270, %v272
    %v274 = vrot.slane %v252, %v273
    %v276 = vunpack.c.l.s4 1966171168
    %v277 = vunpack.c.0.s8 %v276
    %v278 = vlaneseq
    %v279 = vshrl.u32 %v278, 7
    %v280 = vsub.s32 %v277, %v279
    %v281 = vrot.slane %v253, %v280
    %v282 = vcombine.high %v260, %v260
    %v283 = vcombine.high %v267, %v267
    %v284 = vcombine.high %v274, %v274
    %v285 = vcombine.high %v281, %v281
    %v422 = vunpack.c.l.b16 %v101
    %v423 = vunpack.c.l.b16 %v102
    %v424 = vunpack.c.l.b16 %v103
    %v425 = vunpack.c.l.b16 %v104
    %v426 = vunpack.c.l.b16 %v105
    %v427 = vunpack.c.l.b16 %v106
    %v428 = vunpack.c.l.b16 %v107
    %v429 = vunpack.c.l.b16 %v108
    %v430 = vunpack.c.l.b16 %v109
    %v431 = vunpack.c.l.b16 %v110
    %v432 = vunpack.c.l.b16 %v111
    %v433 = vunpack.c.l.b16 %v112
    %v434 = vunpack.c.l.b16 %v113
    %v435 = vunpack.c.l.b16 %v114
    %v436 = vunpack.c.l.b16 %v115
    %v437 = vunpack.c.l.b16 %v116
    %v438 = vunpack.c.l.b16 %v117
    %v439 = vunpack.c.l.b16 %v118
    %v440 = vunpack.c.l.b16 %v119
    %v441 = vunpack.c.l.b16 %v120
    %v442 = vunpack.c.l.b16 %v121
    %v443 = vunpack.c.l.b16 %v122
    %v444 = vunpack.c.l.b16 %v123
    %v445 = vunpack.c.l.b16 %v124
    %v446 = vunpack.c.l.b16 %v125
    %v447 = vunpack.c.l.b16 %v126
    %v448 = vunpack.c.l.b16 %v127
    %v449 = vunpack.c.l.b16 %v128
    %v450 = vunpack.c.l.b16 %v129
    %v451 = vunpack.c.l.b16 %v130
    %v452 = vunpack.c.l.b16 %v131
    %v453 = vunpack.c.l.b16 %v132
    %v454 = vunpack.c.l.b16 %v133
    %v455 = vunpack.c.l.b16 %v134
    %v456 = vunpack.c.l.b16 %v135
    %v457 = vunpack.c.l.b16 %v136
    %v458 = vunpack.c.l.b16 %v137
    %v459 = vunpack.c.l.b16 %v138
    %v460 = vunpack.c.l.b16 %v139
    %v461 = vunpack.c.l.b16 %v140
    %v462 = vunpack.c.l.b16 %v141
    %v463 = vunpack.c.l.b16 %v142
    %v464 = vunpack.c.l.b16 %v143
    %v465 = vunpack.c.l.b16 %v144
    %v466 = vunpack.c.l.b16 %v145
    %v467 = vunpack.c.l.b16 %v146
    %v468 = vunpack.c.l.b16 %v147
    %v469 = vunpack.c.l.b16 %v148
    %v470 = vunpack.c.l.b16 %v149
    %v471 = vunpack.c.l.b16 %v150
    %v472 = vunpack.c.l.b16 %v151
    %v473 = vunpack.c.l.b16 %v152
    %v474 = vunpack.c.l.b16 %v153
    %v475 = vunpack.c.l.b16 %v154
    %v476 = vunpack.c.l.b16 %v155
    %v477 = vunpack.c.l.b16 %v156
    %v478 = vunpack.c.l.b16 %v157
    %v479 = vunpack.c.l.b16 %v158
    %v480 = vunpack.c.l.b16 %v159
    %v481 = vunpack.c.l.b16 %v160
    %v482 = vunpack.c.l.b16 %v161
    %v483 = vunpack.c.l.b16 %v162
    %v484 = vunpack.c.l.b16 %v163
    %v485 = vunpack.c.l.b16 %v164
    %v486 = vunpack.c.l.b16 %v165
    %v487 = vunpack.c.l.b16 %v166
    %v488 = vunpack.c.l.b16 %v167
    %v489 = vunpack.c.l.b16 %v168
    %v490 = vunpack.c.l.b16 %v169
    %v491 = vunpack.c.l.b16 %v170
    %v492 = vunpack.c.l.b16 %v171
    %v493 = vunpack.c.l.b16 %v172
    %v494 = vunpack.c.l.b16 %v173
    %v495 = vunpack.c.l.b16 %v174
    %v496 = vunpack.c.l.b16 %v175
    %v497 = vunpack.c.l.b16 %v176
    %v498 = vunpack.c.l.b16 %v177
    %v499 = vunpack.c.l.b16 %v178
    %v500 = vunpack.c.l.b16 %v179
    %v501 = vunpack.c.l.b16 %v180
    %v502 = vunpack.c.l.b16 %v181
    %v503 = vunpack.c.l.b16 %v182
    %v504 = vunpack.c.l.b16 %v183
    %v505 = vunpack.c.l.b16 %v184
    %v506 = vunpack.c.l.b16 %v185
    %v507 = vunpack.c.l.b16 %v186
    %v508 = vunpack.c.l.b16 %v187
    %v509 = vunpack.c.l.b16 %v188
    %v510 = vunpack.c.l.b16 %v189
    %v511 = vunpack.c.l.b16 %v190
    %v512 = vunpack.c.l.b16 %v191
    %v513 = vunpack.c.l.b16 %v192
    %v514 = vunpack.c.l.b16 %v193
    %v515 = vunpack.c.l.b16 %v194
    %v516 = vunpack.c.l.b16 %v195
    %v517 = vunpack.c.l.b16 %v196
    %v518 = vunpack.c.l.b16 %v197
    %v519 = vunpack.c.l.b16 %v198
    %v520 = vunpack.c.l.b16 %v199
    %v521 = vunpack.c.l.b16 %v200
    %v522 = vunpack.c.l.b16 %v201
    %v523 = vunpack.c.l.b16 %v202
    %v524 = vunpack.c.l.b16 %v203
    %v525 = vunpack.c.l.b16 %v204
    %v526 = vunpack.c.l.b16 %v205
    %v527 = vunpack.c.l.b16 %v206
    %v528 = vunpack.c.l.b16 %v207
    %v529 = vunpack.c.l.b16 %v208
    %v530 = vunpack.c.l.b16 %v209
    %v531 = vunpack.c.l.b16 %v210
    %v532 = vunpack.c.l.b16 %v211
    %v533 = vunpack.c.l.b16 %v212
    %v534 = vunpack.c.l.b16 %v213
    %v535 = vunpack.c.l.b16 %v214
    %v536 = vunpack.c.l.b16 %v215
    %v537 = vunpack.c.l.b16 %v216
    %v538 = vunpack.c.l.b16 %v217
    %v539 = vunpack.c.l.b16 %v218
    %v540 = vunpack.c.l.b16 %v219
    %v541 = vunpack.c.l.b16 %v220
    %v542 = vunpack.c.l.b16 %v221
    %v543 = vunpack.c.l.b16 %v222
    %v544 = vunpack.c.l.b16 %v223
    %v545 = vunpack.c.l.b16 %v224
    %v546 = vunpack.c.l.b16 %v225
    %v547 = vunpack.c.l.b16 %v226
    %v548 = vunpack.c.l.b16 %v227
    %v549 = vunpack.c.l.b16 %v228
    %v550 = vpack.c.b16 %v423, %v422
    %v551 = vpack.c.b16 %v425, %v424
    %v552 = vpack.c.b16 %v427, %v426
    %v553 = vpack.c.b16 %v429, %v428
    %v554 = vpack.c.b16 %v431, %v430
    %v555 = vpack.c.b16 %v433, %v432
    %v556 = vpack.c.b16 %v435, %v434
    %v557 = vpack.c.b16 %v437, %v436
    %v558 = vpack.c.b16 %v439, %v438
    %v559 = vpack.c.b16 %v441, %v440
    %v560 = vpack.c.b16 %v443, %v442
    %v561 = vpack.c.b16 %v445, %v444
    %v562 = vpack.c.b16 %v447, %v446
    %v563 = vpack.c.b16 %v449, %v448
    %v564 = vpack.c.b16 %v451, %v450
    %v565 = vpack.c.b16 %v453, %v452
    %v566 = vpack.c.b16 %v455, %v454
    %v567 = vpack.c.b16 %v457, %v456
    %v568 = vpack.c.b16 %v459, %v458
    %v569 = vpack.c.b16 %v461, %v460
    %v570 = vpack.c.b16 %v463, %v462
    %v571 = vpack.c.b16 %v465, %v464
    %v572 = vpack.c.b16 %v467, %v466
    %v573 = vpack.c.b16 %v469, %v468
    %v574 = vpack.c.b16 %v471, %v470
    %v575 = vpack.c.b16 %v473, %v472
    %v576 = vpack.c.b16 %v475, %v474
    %v577 = vpack.c.b16 %v477, %v476
    %v578 = vpack.c.b16 %v479, %v478
    %v579 = vpack.c.b16 %v481, %v480
    %v580 = vpack.c.b16 %v483, %v482
    %v581 = vpack.c.b16 %v485, %v484
    %v582 = vpack.c.b16 %v487, %v486
    %v583 = vpack.c.b16 %v489, %v488
    %v584 = vpack.c.b16 %v491, %v490
    %v585 = vpack.c.b16 %v493, %v492
    %v586 = vpack.c.b16 %v495, %v494
    %v587 = vpack.c.b16 %v497, %v496
    %v588 = vpack.c.b16 %v499, %v498
    %v589 = vpack.c.b16 %v501, %v500
    %v590 = vpack.c.b16 %v503, %v502
    %v591 = vpack.c.b16 %v505, %v504
    %v592 = vpack.c.b16 %v507, %v506
    %v593 = vpack.c.b16 %v509, %v508
    %v594 = vpack.c.b16 %v511, %v510
    %v595 = vpack.c.b16 %v513, %v512
    %v596 = vpack.c.b16 %v515, %v514
    %v597 = vpack.c.b16 %v517, %v516
    %v598 = vpack.c.b16 %v519, %v518
    %v599 = vpack.c.b16 %v521, %v520
    %v600 = vpack.c.b16 %v523, %v522
    %v601 = vpack.c.b16 %v525, %v524
    %v602 = vpack.c.b16 %v527, %v526
    %v603 = vpack.c.b16 %v529, %v528
    %v604 = vpack.c.b16 %v531, %v530
    %v605 = vpack.c.b16 %v533, %v532
    %v606 = vpack.c.b16 %v535, %v534
    %v607 = vpack.c.b16 %v537, %v536
    %v608 = vpack.c.b16 %v539, %v538
    %v609 = vpack.c.b16 %v541, %v540
    %v610 = vpack.c.b16 %v543, %v542
    %v611 = vpack.c.b16 %v545, %v544
    %v612 = vpack.c.b16 %v547, %v546
    %v613 = vpack.c.b16 %v549, %v548
    %678 = vmatprep.subr.bf16.mxu0 0
    %679 = vmatpush1.bf16.msra.mxu0 %v550
    %680 = vmatprep.subr.bf16.mxu0 0
    %681 = vmatpush1.bf16.msra.mxu0 %v551
    %682 = vmatprep.subr.bf16.mxu0 0
    %683 = vmatpush1.bf16.msra.mxu0 %v552
    %684 = vmatprep.subr.bf16.mxu0 0
    %685 = vmatpush1.bf16.msra.mxu0 %v553
    %686 = vmatprep.subr.bf16.mxu0 0
    %687 = vmatpush1.bf16.msra.mxu0 %v554
    %688 = vmatprep.subr.bf16.mxu0 0
    %689 = vmatpush1.bf16.msra.mxu0 %v555
    %690 = vmatprep.subr.bf16.mxu0 0
    %691 = vmatpush1.bf16.msra.mxu0 %v556
    %692 = vmatprep.subr.bf16.mxu0 0
    %693 = vmatpush1.bf16.msra.mxu0 %v557
    %694 = vmatprep.subr.bf16.mxu0 0
    %695 = vmatpush1.bf16.msra.mxu0 %v558
    %696 = vmatprep.subr.bf16.mxu0 0
    %697 = vmatpush1.bf16.msra.mxu0 %v559
    %698 = vmatprep.subr.bf16.mxu0 0
    %699 = vmatpush1.bf16.msra.mxu0 %v560
    %700 = vmatprep.subr.bf16.mxu0 0
    %701 = vmatpush1.bf16.msra.mxu0 %v561
    %702 = vmatprep.subr.bf16.mxu0 0
    %703 = vmatpush1.bf16.msra.mxu0 %v562
    %704 = vmatprep.subr.bf16.mxu0 0
    %705 = vmatpush1.bf16.msra.mxu0 %v563
    %706 = vmatprep.subr.bf16.mxu0 0
    %707 = vmatpush1.bf16.msra.mxu0 %v564
    %708 = vmatprep.subr.bf16.mxu0 0
    %709 = vmatpush1.bf16.msra.mxu0 %v565
    %710 = vmatprep.mubr.bf16.mxu0 %v274
    %711 = vmatmul.mubr.bf16.gmra.mrb[0].mxu0 %v260
    %v712 = vpop.f32.mrb[0].mxu0
    %v713 = vadd.f32 %v234, %v712
    %v714 = vpop.f32.mrb[0].mxu0
    %v715 = vpop.f32.mrb[0].mxu0
    %v716 = vpop.f32.mrb[0].mxu0
    %717 = vdwg.mxu0
    %718 = vmatprep.subr.bf16.mxu0 0
    %719 = vmatpush1.bf16.msra.mxu0 %v566
    %720 = vmatprep.subr.bf16.mxu0 0
    %721 = vmatpush1.bf16.msra.mxu0 %v567
    %722 = vmatprep.subr.bf16.mxu0 0
    %723 = vmatpush1.bf16.msra.mxu0 %v568
    %724 = vmatprep.subr.bf16.mxu0 0
    %725 = vmatpush1.bf16.msra.mxu0 %v569
    %726 = vmatprep.subr.bf16.mxu0 0
    %727 = vmatpush1.bf16.msra.mxu0 %v570
    %728 = vmatprep.subr.bf16.mxu0 0
    %729 = vmatpush1.bf16.msra.mxu0 %v571
    %730 = vmatprep.subr.bf16.mxu0 0
    %731 = vmatpush1.bf16.msra.mxu0 %v572
    %732 = vmatprep.subr.bf16.mxu0 0
    %733 = vmatpush1.bf16.msra.mxu0 %v573
    %734 = vmatprep.subr.bf16.mxu0 0
    %735 = vmatpush1.bf16.msra.mxu0 %v574
    %736 = vmatprep.subr.bf16.mxu0 0
    %737 = vmatpush1.bf16.msra.mxu0 %v575
    %738 = vmatprep.subr.bf16.mxu0 0
    %739 = vmatpush1.bf16.msra.mxu0 %v576
    %740 = vmatprep.subr.bf16.mxu0 0
    %741 = vmatpush1.bf16.msra.mxu0 %v577
    %742 = vmatprep.subr.bf16.mxu0 0
    %743 = vmatpush1.bf16.msra.mxu0 %v578
    %744 = vmatprep.subr.bf16.mxu0 0
    %745 = vmatpush1.bf16.msra.mxu0 %v579
    %746 = vmatprep.subr.bf16.mxu0 0
    %747 = vmatpush1.bf16.msra.mxu0 %v580
    %748 = vmatprep.subr.bf16.mxu0 0
    %749 = vmatpush1.bf16.msra.mxu0 %v581
    %750 = vmatprep.mubr.bf16.mxu0 %v284
    %751 = vmatmul.mubr.bf16.gmra.mrb[0].mxu0 %v282
    %v752 = vpop.f32.mrb[0].mxu0
    %v753 = vadd.f32 %v713, %v752
    %v754 = vpop.f32.mrb[0].mxu0
    %v755 = vpop.f32.mrb[0].mxu0
    %v756 = vpop.f32.mrb[0].mxu0
    %757 = vdwg.mxu0
    %758 = vmatprep.subr.bf16.mxu0 0
    %759 = vmatpush1.bf16.msra.mxu0 %v582
    %760 = vmatprep.subr.bf16.mxu0 0
    %761 = vmatpush1.bf16.msra.mxu0 %v583
    %762 = vmatprep.subr.bf16.mxu0 0
    %763 = vmatpush1.bf16.msra.mxu0 %v584
    %764 = vmatprep.subr.bf16.mxu0 0
    %765 = vmatpush1.bf16.msra.mxu0 %v585
    %766 = vmatprep.subr.bf16.mxu0 0
    %767 = vmatpush1.bf16.msra.mxu0 %v586
    %768 = vmatprep.subr.bf16.mxu0 0
    %769 = vmatpush1.bf16.msra.mxu0 %v587
    %770 = vmatprep.subr.bf16.mxu0 0
    %771 = vmatpush1.bf16.msra.mxu0 %v588
    %772 = vmatprep.subr.bf16.mxu0 0
    %773 = vmatpush1.bf16.msra.mxu0 %v589
    %774 = vmatprep.subr.bf16.mxu0 0
    %775 = vmatpush1.bf16.msra.mxu0 %v590
    %776 = vmatprep.subr.bf16.mxu0 0
    %777 = vmatpush1.bf16.msra.mxu0 %v591
    %778 = vmatprep.subr.bf16.mxu0 0
    %779 = vmatpush1.bf16.msra.mxu0 %v592
    %780 = vmatprep.subr.bf16.mxu0 0
    %781 = vmatpush1.bf16.msra.mxu0 %v593
    %782 = vmatprep.subr.bf16.mxu0 0
    %783 = vmatpush1.bf16.msra.mxu0 %v594
    %784 = vmatprep.subr.bf16.mxu0 0
    %785 = vmatpush1.bf16.msra.mxu0 %v595
    %786 = vmatprep.subr.bf16.mxu0 0
    %787 = vmatpush1.bf16.msra.mxu0 %v596
    %788 = vmatprep.subr.bf16.mxu0 0
    %789 = vmatpush1.bf16.msra.mxu0 %v597
    %790 = vmatprep.mubr.bf16.mxu0 %v281
    %791 = vmatmul.mubr.bf16.gmra.mrb[0].mxu0 %v267
    %v792 = vpop.f32.mrb[0].mxu0
    %v793 = vadd.f32 %v753, %v792
    %v794 = vpop.f32.mrb[0].mxu0
    %v795 = vpop.f32.mrb[0].mxu0
    %v796 = vpop.f32.mrb[0].mxu0
    %797 = vdwg.mxu0
    %798 = vmatprep.subr.bf16.mxu0 0
    %799 = vmatpush1.bf16.msra.mxu0 %v598
    %800 = vmatprep.subr.bf16.mxu0 0
    %801 = vmatpush1.bf16.msra.mxu0 %v599
    %802 = vmatprep.subr.bf16.mxu0 0
    %803 = vmatpush1.bf16.msra.mxu0 %v600
    %804 = vmatprep.subr.bf16.mxu0 0
    %805 = vmatpush1.bf16.msra.mxu0 %v601
    %806 = vmatprep.subr.bf16.mxu0 0
    %807 = vmatpush1.bf16.msra.mxu0 %v602
    %808 = vmatprep.subr.bf16.mxu0 0
    %809 = vmatpush1.bf16.msra.mxu0 %v603
    %810 = vmatprep.subr.bf16.mxu0 0
    %811 = vmatpush1.bf16.msra.mxu0 %v604
    %812 = vmatprep.subr.bf16.mxu0 0
    %813 = vmatpush1.bf16.msra.mxu0 %v605
    %814 = vmatprep.subr.bf16.mxu0 0
    %815 = vmatpush1.bf16.msra.mxu0 %v606
    %816 = vmatprep.subr.bf16.mxu0 0
    %817 = vmatpush1.bf16.msra.mxu0 %v607
    %818 = vmatprep.subr.bf16.mxu0 0
    %819 = vmatpush1.bf16.msra.mxu0 %v608
    %820 = vmatprep.subr.bf16.mxu0 0
    %821 = vmatpush1.bf16.msra.mxu0 %v609
    %822 = vmatprep.subr.bf16.mxu0 0
    %823 = vmatpush1.bf16.msra.mxu0 %v610
    %824 = vmatprep.subr.bf16.mxu0 0
    %825 = vmatpush1.bf16.msra.mxu0 %v611
    %826 = vmatprep.subr.bf16.mxu0 0
    %827 = vmatpush1.bf16.msra.mxu0 %v612
    %828 = vmatprep.subr.bf16.mxu0 0
    %829 = vmatpush1.bf16.msra.mxu0 %v613
    %830 = vmatprep.mubr.bf16.mxu0 %v285
    %831 = vmatmul.mubr.bf16.gmra.mrb[0].mxu0 %v283
    %v832 = vpop.f32.mrb[0].mxu0
    %v833 = vadd.f32 %v793, %v832
    %v834 = vpop.f32.mrb[0].mxu0
    %v835 = vpop.f32.mrb[0].mxu0
    %v836 = vpop.f32.mrb[0].mxu0
    %837 = vdwg.mxu0
    %v838 = vpack.c.bf16 %v833, %v833
    %v839 = vld [vmem:[#allocation7] sm:$0xf]
    %v840 = vld [vmem:[#allocation7 + $0x4] sm:$0xf]
    %v841 = vld [vmem:[#allocation7 + $0x8] sm:$0xf]
    %v842 = vld [vmem:[#allocation7 + $0xc] sm:$0xf]
    %v843 = vld [vmem:[#allocation7 + $0x10] sm:$0xf]
    %v844 = vld [vmem:[#allocation7 + $0x14] sm:$0xf]
    %v845 = vld [vmem:[#allocation7 + $0x18] sm:$0xf]
    %v846 = vld [vmem:[#allocation7 + $0x1c] sm:$0xf]
    %v847 = vld [vmem:[#allocation7 + $0x20] sm:$0xf]
    %v848 = vld [vmem:[#allocation7 + $0x24] sm:$0xf]
    %v849 = vld [vmem:[#allocation7 + $0x28] sm:$0xf]
    %v850 = vld [vmem:[#allocation7 + $0x2c] sm:$0xf]
    %v851 = vld [vmem:[#allocation7 + $0x30] sm:$0xf]
    %v852 = vld [vmem:[#allocation7 + $0x34] sm:$0xf]
    %v853 = vld [vmem:[#allocation7 + $0x38] sm:$0xf]
    %v854 = vld [vmem:[#allocation7 + $0x3c] sm:$0xf]
    %v855 = vld [vmem:[%s4] sm:$0x1]
    %v857 = vlaneseq
    %v858 = vshrl.u32 %v857, 7
    %v859 = vsub.s32 0, %v858
    %v860 = vrot.slane %v855, %v859
    %v878 = vunpack.c.l.b16 %v839
    %v879 = vunpack.c.l.b16 %v840
    %v880 = vunpack.c.l.b16 %v841
    %v881 = vunpack.c.l.b16 %v842
    %v882 = vunpack.c.l.b16 %v843
    %v883 = vunpack.c.l.b16 %v844
    %v884 = vunpack.c.l.b16 %v845
    %v885 = vunpack.c.l.b16 %v846
    %v886 = vunpack.c.l.b16 %v847
    %v887 = vunpack.c.l.b16 %v848
    %v888 = vunpack.c.l.b16 %v849
    %v889 = vunpack.c.l.b16 %v850
    %v890 = vunpack.c.l.b16 %v851
    %v891 = vunpack.c.l.b16 %v852
    %v892 = vunpack.c.l.b16 %v853
    %v893 = vunpack.c.l.b16 %v854
    %v894 = vpack.c.b16 %v879, %v878
    %v895 = vpack.c.b16 %v881, %v880
    %v896 = vpack.c.b16 %v883, %v882
    %v897 = vpack.c.b16 %v885, %v884
    %v898 = vpack.c.b16 %v887, %v886
    %v899 = vpack.c.b16 %v889, %v888
    %v900 = vpack.c.b16 %v891, %v890
    %v901 = vpack.c.b16 %v893, %v892
    %910 = vmatprep.subr.bf16.mxu0 0
    %911 = vmatpush1.bf16.msra.mxu0 %v894
    %912 = vmatprep.subr.bf16.mxu0 0
    %913 = vmatpush1.bf16.msra.mxu0 %v895
    %914 = vmatprep.subr.bf16.mxu0 0
    %915 = vmatpush1.bf16.msra.mxu0 %v896
    %916 = vmatprep.subr.bf16.mxu0 0
    %917 = vmatpush1.bf16.msra.mxu0 %v897
    %918 = vmatprep.subr.bf16.mxu0 0
    %919 = vmatpush1.bf16.msra.mxu0 %v898
    %920 = vmatprep.subr.bf16.mxu0 0
    %921 = vmatpush1.bf16.msra.mxu0 %v899
    %922 = vmatprep.subr.bf16.mxu0 0
    %923 = vmatpush1.bf16.msra.mxu0 %v900
    %924 = vmatprep.subr.bf16.mxu0 0
    %925 = vmatpush1.bf16.msra.mxu0 %v901
    %926 = vmatprep.subr.bf16.mxu0 0
    %927 = vmatpush1.bf16.msra.mxu0 0
    %928 = vmatprep.subr.bf16.mxu0 0
    %929 = vmatpush1.bf16.msra.mxu0 0
    %930 = vmatprep.subr.bf16.mxu0 0
    %931 = vmatpush1.bf16.msra.mxu0 0
    %932 = vmatprep.subr.bf16.mxu0 0
    %933 = vmatpush1.bf16.msra.mxu0 0
    %934 = vmatprep.subr.bf16.mxu0 0
    %935 = vmatpush1.bf16.msra.mxu0 0
    %936 = vmatprep.subr.bf16.mxu0 0
    %937 = vmatpush1.bf16.msra.mxu0 0
    %938 = vmatprep.subr.bf16.mxu0 0
    %939 = vmatpush1.bf16.msra.mxu0 0
    %940 = vmatprep.subr.bf16.mxu0 0
    %941 = vmatpush1.bf16.msra.mxu0 0
    %942 = vmatprep.mubr.bf16.mxu0 0
    %943 = vmatmul.mubr.bf16.gmra.mrb[0].mxu0 %v838
    %v944 = vpop.f32.mrb[0].mxu0
    %v945 = vadd.f32 %v860, %v944
    %v946 = vpop.f32.mrb[0].mxu0
    %v947 = vpop.f32.mrb[0].mxu0
    %v948 = vpop.f32.mrb[0].mxu0
    %949 = vdwg.mxu0
    %v950 = vmax.f32 %v945, 0.0
    %v951 = vpack.c.bf16 %v950, %v950
    %v952 = vld [vmem:[#allocation8] sm:$0xf]
    %v953 = vld [vmem:[#allocation8 + $0x4] sm:$0xf]
    %v954 = vld [vmem:[#allocation8 + $0x8] sm:$0xf]
    %v955 = vld [vmem:[#allocation8 + $0xc] sm:$0xf]
    %v956 = vld [vmem:[#allocation8 + $0x10] sm:$0xf]
    %v957 = vld [vmem:[#allocation8 + $0x14] sm:$0xf]
    %v958 = vld [vmem:[#allocation8 + $0x18] sm:$0xf]
    %v959 = vld [vmem:[#allocation8 + $0x1c] sm:$0xf]
    %v960 = vld [vmem:[#allocation8 + $0x20] sm:$0xf]
    %v961 = vld [vmem:[#allocation8 + $0x24] sm:$0xf]
    %v962 = vld [vmem:[#allocation8 + $0x28] sm:$0xf]
    %v963 = vld [vmem:[#allocation8 + $0x2c] sm:$0xf]
    %v964 = vld [vmem:[#allocation8 + $0x30] sm:$0xf]
    %v965 = vld [vmem:[#allocation8 + $0x34] sm:$0xf]
    %v966 = vld [vmem:[#allocation8 + $0x38] sm:$0xf]
    %v967 = vld [vmem:[#allocation8 + $0x3c] sm:$0xf]
    %v968 = vld [vmem:[%s6] sm:$0x1]
    %v970 = vlaneseq
    %v971 = vshrl.u32 %v970, 7
    %v972 = vsub.s32 0, %v971
    %v973 = vrot.slane %v968, %v972
    %v991 = vunpack.c.l.b16 %v952
    %v992 = vunpack.c.l.b16 %v953
    %v993 = vunpack.c.l.b16 %v954
    %v994 = vunpack.c.l.b16 %v955
    %v995 = vunpack.c.l.b16 %v956
    %v996 = vunpack.c.l.b16 %v957
    %v997 = vunpack.c.l.b16 %v958
    %v998 = vunpack.c.l.b16 %v959
    %v999 = vunpack.c.l.b16 %v960
    %v1000 = vunpack.c.l.b16 %v961
    %v1001 = vunpack.c.l.b16 %v962
    %v1002 = vunpack.c.l.b16 %v963
    %v1003 = vunpack.c.l.b16 %v964
    %v1004 = vunpack.c.l.b16 %v965
    %v1005 = vunpack.c.l.b16 %v966
    %v1006 = vunpack.c.l.b16 %v967
    %v1007 = vpack.c.b16 %v992, %v991
    %v1008 = vpack.c.b16 %v994, %v993
    %v1009 = vpack.c.b16 %v996, %v995
    %v1010 = vpack.c.b16 %v998, %v997
    %v1011 = vpack.c.b16 %v1000, %v999
    %v1012 = vpack.c.b16 %v1002, %v1001
    %v1013 = vpack.c.b16 %v1004, %v1003
    %v1014 = vpack.c.b16 %v1006, %v1005
    %1023 = vmatprep.subr.bf16.mxu0 0
    %1024 = vmatpush1.bf16.msra.mxu0 %v1007
    %1025 = vmatprep.subr.bf16.mxu0 0
    %1026 = vmatpush1.bf16.msra.mxu0 %v1008
    %1027 = vmatprep.subr.bf16.mxu0 0
    %1028 = vmatpush1.bf16.msra.mxu0 %v1009
    %1029 = vmatprep.subr.bf16.mxu0 0
    %1030 = vmatpush1.bf16.msra.mxu0 %v1010
    %1031 = vmatprep.subr.bf16.mxu0 0
    %1032 = vmatpush1.bf16.msra.mxu0 %v1011
    %1033 = vmatprep.subr.bf16.mxu0 0
    %1034 = vmatpush1.bf16.msra.mxu0 %v1012
    %1035 = vmatprep.subr.bf16.mxu0 0
    %1036 = vmatpush1.bf16.msra.mxu0 %v1013
    %1037 = vmatprep.subr.bf16.mxu0 0
    %1038 = vmatpush1.bf16.msra.mxu0 %v1014
    %1039 = vmatprep.subr.bf16.mxu0 0
    %1040 = vmatpush1.bf16.msra.mxu0 0
    %1041 = vmatprep.subr.bf16.mxu0 0
    %1042 = vmatpush1.bf16.msra.mxu0 0
    %1043 = vmatprep.subr.bf16.mxu0 0
    %1044 = vmatpush1.bf16.msra.mxu0 0
    %1045 = vmatprep.subr.bf16.mxu0 0
    %1046 = vmatpush1.bf16.msra.mxu0 0
    %1047 = vmatprep.subr.bf16.mxu0 0
    %1048 = vmatpush1.bf16.msra.mxu0 0
    %1049 = vmatprep.subr.bf16.mxu0 0
    %1050 = vmatpush1.bf16.msra.mxu0 0
    %1051 = vmatprep.subr.bf16.mxu0 0
    %1052 = vmatpush1.bf16.msra.mxu0 0
    %1053 = vmatprep.subr.bf16.mxu0 0
    %1054 = vmatpush1.bf16.msra.mxu0 0
    %1055 = vmatprep.mubr.bf16.mxu0 0
    %1056 = vmatmul.mubr.bf16.gmra.mrb[0].mxu0 %v951
    %v1057 = vpop.f32.mrb[0].mxu0
    %v1058 = vadd.f32 %v973, %v1057
    %v1059 = vpop.f32.mrb[0].mxu0
    %v1060 = vpop.f32.mrb[0].mxu0
    %v1061 = vpop.f32.mrb[0].mxu0
    %1062 = vdwg.mxu0
    %v1063 = vmax.f32 %v1058, 0.0
    %v1064 = vpack.c.bf16 %v1063, %v1063
    %v1065 = vld [vmem:[#allocation10] sm:$0xf]
    %v1066 = vld [vmem:[#allocation10 + $0x4] sm:$0xf]
    %v1067 = vld [vmem:[#allocation10 + $0x8] sm:$0xf]
    %v1068 = vld [vmem:[#allocation10 + $0xc] sm:$0xf]
    %v1069 = vld [vmem:[#allocation10 + $0x10] sm:$0xf]
    %v1070 = vld [vmem:[#allocation10 + $0x14] sm:$0xf]
    %v1071 = vld [vmem:[#allocation10 + $0x18] sm:$0xf]
    %v1072 = vld [vmem:[#allocation10 + $0x1c] sm:$0xf]
    %v1073 = vld [vmem:[#allocation10 + $0x20] sm:$0xf]
    %v1074 = vld [vmem:[#allocation10 + $0x24] sm:$0xf]
    %v1075 = vld [vmem:[#allocation10 + $0x28] sm:$0xf]
    %v1076 = vld [vmem:[#allocation10 + $0x2c] sm:$0xf]
    %v1077 = vld [vmem:[#allocation10 + $0x30] sm:$0xf]
    %v1078 = vld [vmem:[#allocation10 + $0x34] sm:$0xf]
    %v1079 = vld [vmem:[#allocation10 + $0x38] sm:$0xf]
    %v1080 = vld [vmem:[#allocation10 + $0x3c] sm:$0xf]
    %v1081 = vld [vmem:[%s8] sm:$0x1]
    %v1083 = vlaneseq
    %v1084 = vshrl.u32 %v1083, 7
    %v1085 = vsub.s32 0, %v1084
    %v1086 = vrot.slane %v1081, %v1085
    %v1104 = vunpack.c.l.b16 %v1065
    %v1105 = vunpack.c.l.b16 %v1066
    %v1106 = vunpack.c.l.b16 %v1067
    %v1107 = vunpack.c.l.b16 %v1068
    %v1108 = vunpack.c.l.b16 %v1069
    %v1109 = vunpack.c.l.b16 %v1070
    %v1110 = vunpack.c.l.b16 %v1071
    %v1111 = vunpack.c.l.b16 %v1072
    %v1112 = vunpack.c.l.b16 %v1073
    %v1113 = vunpack.c.l.b16 %v1074
    %v1114 = vunpack.c.l.b16 %v1075
    %v1115 = vunpack.c.l.b16 %v1076
    %v1116 = vunpack.c.l.b16 %v1077
    %v1117 = vunpack.c.l.b16 %v1078
    %v1118 = vunpack.c.l.b16 %v1079
    %v1119 = vunpack.c.l.b16 %v1080
    %v1120 = vpack.c.b16 %v1105, %v1104
    %v1121 = vpack.c.b16 %v1107, %v1106
    %v1122 = vpack.c.b16 %v1109, %v1108
    %v1123 = vpack.c.b16 %v1111, %v1110
    %v1124 = vpack.c.b16 %v1113, %v1112
    %v1125 = vpack.c.b16 %v1115, %v1114
    %v1126 = vpack.c.b16 %v1117, %v1116
    %v1127 = vpack.c.b16 %v1119, %v1118
    %1136 = vmatprep.subr.bf16.mxu0 0
    %1137 = vmatpush1.bf16.msra.mxu0 %v1120
    %1138 = vmatprep.subr.bf16.mxu0 0
    %1139 = vmatpush1.bf16.msra.mxu0 %v1121
    %1140 = vmatprep.subr.bf16.mxu0 0
    %1141 = vmatpush1.bf16.msra.mxu0 %v1122
    %1142 = vmatprep.subr.bf16.mxu0 0
    %1143 = vmatpush1.bf16.msra.mxu0 %v1123
    %1144 = vmatprep.subr.bf16.mxu0 0
    %1145 = vmatpush1.bf16.msra.mxu0 %v1124
    %1146 = vmatprep.subr.bf16.mxu0 0
    %1147 = vmatpush1.bf16.msra.mxu0 %v1125
    %1148 = vmatprep.subr.bf16.mxu0 0
    %1149 = vmatpush1.bf16.msra.mxu0 %v1126
    %1150 = vmatprep.subr.bf16.mxu0 0
    %1151 = vmatpush1.bf16.msra.mxu0 %v1127
    %1152 = vmatprep.subr.bf16.mxu0 0
    %1153 = vmatpush1.bf16.msra.mxu0 0
    %1154 = vmatprep.subr.bf16.mxu0 0
    %1155 = vmatpush1.bf16.msra.mxu0 0
    %1156 = vmatprep.subr.bf16.mxu0 0
    %1157 = vmatpush1.bf16.msra.mxu0 0
    %1158 = vmatprep.subr.bf16.mxu0 0
    %1159 = vmatpush1.bf16.msra.mxu0 0
    %1160 = vmatprep.subr.bf16.mxu0 0
    %1161 = vmatpush1.bf16.msra.mxu0 0
    %1162 = vmatprep.subr.bf16.mxu0 0
    %1163 = vmatpush1.bf16.msra.mxu0 0
    %1164 = vmatprep.subr.bf16.mxu0 0
    %1165 = vmatpush1.bf16.msra.mxu0 0
    %1166 = vmatprep.subr.bf16.mxu0 0
    %1167 = vmatpush1.bf16.msra.mxu0 0
    %1168 = vmatprep.mubr.bf16.mxu0 0
    %1169 = vmatmul.mubr.bf16.gmra.mrb[0].mxu0 %v1064
    %v1170 = vpop.f32.mrb[0].mxu0
    %v1171 = vadd.f32 %v1086, %v1170
    %v1172 = vpop.f32.mrb[0].mxu0
    %v1173 = vpop.f32.mrb[0].mxu0
    %v1174 = vpop.f32.mrb[0].mxu0
    %1175 = vdwg.mxu0
    %1176 = vst [vmem:[#allocation11] sm:$0x3] %v1171
    // Predicated region
    $region58: #{tpu_custom_call.1} parent=1 // pred_check
      _
    $region59: #{tpu_custom_call.1} parent=1 // pred_check_branch
      %1178 = sbr.rel (0) target = $region61
    $region60: #{tpu_custom_call.1} parent=1 // pred_region
      %s1180 = ssub.s32 32, 32
      %1181 = vsyncadd [#allocation4], %s1180
      %s1183 = sshll.u32 [#allocation11], 4
      %s1184 = int_to_ptr.vmem [resolvable:$true] %s1183
      %1186 = dma.vmem_to_hbm [thread:$0]  %s1184, 32, %s9, [#allocation4]
    $region61: #{tpu_custom_call.1} parent=1 // pred_fallthru
      _
    // Predicated region
    $region62: #{tpu_custom_call.1} parent=1 // pred_check
      _
    $region63: #{tpu_custom_call.1} parent=1 // pred_check_branch
      %1188 = sbr.rel (0) target = $region65
    $region64: #{tpu_custom_call.1} parent=1 // pred_region
      %1189 = dma.done [#allocation4], 32
    $region65: #{tpu_custom_call.1} parent=1 // pred_fallthru
      _
    %1190 = vsyncpa [#allocation3], 1
    %1191 = vsyncpa [#allocation6], 1
    %1192 = vsyncpa [#allocation9], 1
    %1193 = vsyncpa [#allocation4], 1

</llo_original>
